<compile_context>
chip_gen: v5e
topology: v5e:2x2
jax: 0.10.0
libtpu: 0.0.40
codegen_flags: <defaults>
</compile_context>

<pallas_src>
import jax
import jax.numpy as jnp
from jax.experimental import pallas as pl
from jax.experimental.pallas import tpu as pltpu


def _choose_tile_n(n: int, c: int, itemsize: int) -> int:
    """Pick a row-tile size: ~2 MiB of raw logits per step, multiple of 8 rows."""
    n_pad = ((n + 7) // 8) * 8
    target_tile_bytes = 2 * 1024 * 1024
    rows = target_tile_bytes // max(1, c * itemsize)
    rows = min(rows, 32768)              # cap per-step rows
    rows = max(8, (rows // 8) * 8)       # sublane-aligned
    rows = min(rows, n_pad)              # never bigger than (padded) batch
    return int(rows)


def _make_ce_kernel(n_total: int, tile_n: int):
    def kernel(logits_ref, labels_ref, psum_ref):
        # logits_ref: VMEM (tile_n, C)  -- native dtype (f32 / bf16 / ...)
        # labels_ref: VMEM (tile_n, 1)  -- int32 class indices
        # psum_ref:   SMEM (1, 1)       -- f32 partial NLL sum for this tile
        x = logits_ref[...].astype(jnp.float32)                    # (tn, C)
        tn, c = x.shape

        # numerically-stable logsumexp along the class (lane) axis
        m = jnp.max(x, axis=-1, keepdims=True)                     # (tn, 1)
        lse = jnp.log(jnp.sum(jnp.exp(x - m), axis=-1, keepdims=True))

        # pick the label logit via lane-iota select + reduce (no dynamic gather)
        labels = labels_ref[...]                                   # (tn, 1)
        col = jax.lax.broadcasted_iota(jnp.int32, (tn, c), 1)      # (tn, C)
        picked = jnp.sum(jnp.where(col == labels, x, 0.0),
                         axis=-1, keepdims=True)                   # (tn, 1)

        nll = (m + lse) - picked                                   # (tn, 1)

        # mask padded tail rows so they contribute exactly 0
        row = jax.lax.broadcasted_iota(jnp.int32, (tn, 1), 0)
        valid = (pl.program_id(0) * tile_n + row) < n_total
        nll = jnp.where(valid, nll, 0.0)

        psum_ref[0, 0] = jnp.sum(nll)

    return kernel


def siamese_metric(outputs: jax.Array, labels: jax.Array) -> jax.Array:
    """Equivalent of SiameseMetric.forward == F.cross_entropy(outputs, labels).

    outputs: [N, C] float logits (any float dtype; streamed as-is)
    labels:  [N]    integer class indices
    returns: scalar float32 mean loss
    """
    n, c = outputs.shape
    labels2d = labels.astype(jnp.int32).reshape(n, 1)

    itemsize = jnp.dtype(outputs.dtype).itemsize
    tile_n = _choose_tile_n(n, c, itemsize)
    num_tiles = pl.cdiv(n, tile_n)

    partials = pl.pallas_call(
        _make_ce_kernel(n, tile_n),
        out_shape=jax.ShapeDtypeStruct((num_tiles, 1), jnp.float32),
        grid=(num_tiles,),
        in_specs=[
            pl.BlockSpec((tile_n, c), lambda i: (i, 0)),
            pl.BlockSpec((tile_n, 1), lambda i: (i, 0)),
        ],
        out_specs=pl.BlockSpec((1, 1), lambda i: (i, 0),
                               memory_space=pltpu.MemorySpace.SMEM),
        compiler_params=pltpu.CompilerParams(
            dimension_semantics=("parallel",),   # megacore-shardable on v7x
            vmem_limit_bytes=32 * 1024 * 1024,   # safe on v5e/v6e/v7x
        ),
        cost_estimate=pl.CostEstimate(
            flops=6 * n * c,
            transcendentals=n * c,               # one exp per element
            bytes_accessed=n * c * itemsize + n * 4 + num_tiles * 4,
        ),
    )(outputs, labels2d)

    # tiny finalize outside the kernel: sum of per-tile partials / true N
    return jnp.sum(partials) / jnp.float32(n)


if __name__ == "__main__":
    key = jax.random.PRNGKey(0)
    k1, k2, k3, k4, k5, k6 = jax.random.split(key, 6)

    # main check: batch of 8 examples, 32 classes
    N, C = 8, 32
    logits = jax.random.normal(k1, (N, C), dtype=jnp.float32)
    labels = jax.random.randint(k2, (N,), 0, C, dtype=jnp.int32)

    loss = jax.block_until_ready(siamese_metric(logits, labels))
    logp_ref = jax.nn.log_softmax(logits, axis=-1)
    ref = -jnp.mean(logp_ref[jnp.arange(N), labels])
    assert jnp.allclose(loss, ref, atol=1e-5), (loss, ref)

    # tail-masking check: N not a multiple of the 8-row sublane tile
    N2, C2 = 13, 40
    logits2 = jax.random.normal(k3, (N2, C2), dtype=jnp.float32)
    labels2 = jax.random.randint(k4, (N2,), 0, C2, dtype=jnp.int32)

    loss2 = jax.block_until_ready(siamese_metric(logits2, labels2))
    logp_ref2 = jax.nn.log_softmax(logits2, axis=-1)
    ref2 = -jnp.mean(logp_ref2[jnp.arange(N2), labels2])
    assert jnp.allclose(loss2, ref2, atol=1e-5), (loss2, ref2)

    # bf16 input check: streamed as bf16, accumulated in f32 inside the kernel
    N3, C3 = 24, 16
    logits3 = jax.random.normal(k5, (N3, C3), dtype=jnp.float32)
    labels3 = jax.random.randint(k6, (N3,), 0, C3, dtype=jnp.int32)

    loss3 = jax.block_until_ready(
        siamese_metric(logits3.astype(jnp.bfloat16), labels3))
    logp_ref3 = jax.nn.log_softmax(
        logits3.astype(jnp.bfloat16).astype(jnp.float32), axis=-1)
    ref3 = -jnp.mean(logp_ref3[jnp.arange(N3), labels3])
    assert jnp.allclose(loss3, ref3, atol=2e-2), (loss3, ref3)

    print("KERNEL_OK")
</pallas_src>

<mosaic_0001>
module attributes {stable_mosaic.version = 11 : i64} {
  func.func @kernel(%arg0: i32, %arg1: memref<8x32xf32, #tpu.memory_space<vmem>>, %arg2: memref<8x1xi32, #tpu.memory_space<vmem>>, %arg3: memref<1x1xf32, #tpu.memory_space<smem>>) attributes {dimension_semantics = [#tpu.dimension_semantics<parallel>], iteration_bounds = array<i64: 1>, scalar_prefetch = 0 : i64, scratch_operands = 0 : i64, tpu.core_type = #tpu.core_type<tc>, window_params = [{transform_indices = @transform_0, window_bounds = array<i64: 8, 32>}, {transform_indices = @transform_1, window_bounds = array<i64: 8, 1>}, {transform_indices = @transform_2, window_bounds = array<i64: 1, 1>}]} {
    %c0 = arith.constant 0 : index
    %c0_0 = arith.constant 0 : index
    %0 = vector.load %arg1[%c0, %c0_0] : memref<8x32xf32, #tpu.memory_space<vmem>>, vector<8x32xf32>
    %cst = arith.constant dense<0xFF800000> : vector<8xf32>
    %1 = vector.multi_reduction <maximumf>, %0, %cst [1] : vector<8x32xf32> to vector<8xf32>
    %2 = vector.shape_cast %1 : vector<8xf32> to vector<8x1xf32>
    %3 = vector.broadcast %2 : vector<8x1xf32> to vector<8x32xf32>
    %4 = arith.subf %0, %3 : vector<8x32xf32>
    %5 = math.exp %4 : vector<8x32xf32>
    %cst_1 = arith.constant dense<0.000000e+00> : vector<8xf32>
    %6 = vector.multi_reduction <add>, %5, %cst_1 [1] : vector<8x32xf32> to vector<8xf32>
    %7 = vector.shape_cast %6 : vector<8xf32> to vector<8x1xf32>
    %8 = math.log %7 : vector<8x1xf32>
    %c0_2 = arith.constant 0 : index
    %c0_3 = arith.constant 0 : index
    %9 = vector.load %arg2[%c0_2, %c0_3] : memref<8x1xi32, #tpu.memory_space<vmem>>, vector<8x1xi32>
    %10 = tpu.iota {dimensions = array<i32: 1>} : vector<8x32xi32>
    %11 = vector.broadcast %9 : vector<8x1xi32> to vector<8x32xi32>
    %12 = arith.cmpi eq, %10, %11 : vector<8x32xi32>
    %cst_4 = arith.constant 0.000000e+00 : f32
    %13 = vector.broadcast %cst_4 : f32 to vector<8x32xf32>
    %14 = arith.select %12, %0, %13 : vector<8x32xi1>, vector<8x32xf32>
    %cst_5 = arith.constant dense<0.000000e+00> : vector<8xf32>
    %15 = vector.multi_reduction <add>, %14, %cst_5 [1] : vector<8x32xf32> to vector<8xf32>
    %16 = vector.shape_cast %15 : vector<8xf32> to vector<8x1xf32>
    %17 = arith.addf %2, %8 : vector<8x1xf32>
    %18 = arith.subf %17, %16 : vector<8x1xf32>
    %19 = tpu.iota {dimensions = array<i32: 0>} : vector<8x1xi32>
    %c8_i32 = arith.constant 8 : i32
    %20 = arith.muli %arg0, %c8_i32 : i32
    %21 = vector.broadcast %20 : i32 to vector<8x1xi32>
    %22 = arith.addi %21, %19 : vector<8x1xi32>
    %c8_i32_6 = arith.constant 8 : i32
    %23 = vector.broadcast %c8_i32_6 : i32 to vector<8x1xi32>
    %24 = arith.cmpi slt, %22, %23 : vector<8x1xi32>
    %cst_7 = arith.constant 0.000000e+00 : f32
    %25 = vector.broadcast %cst_7 : f32 to vector<8x1xf32>
    %26 = arith.select %24, %18, %25 : vector<8x1xi1>, vector<8x1xf32>
    %27 = vector.shape_cast %26 : vector<8x1xf32> to vector<1x8x1xf32>
    %cst_8 = arith.constant dense<0.000000e+00> : vector<1xf32>
    %28 = vector.multi_reduction <add>, %27, %cst_8 [1, 2] : vector<1x8x1xf32> to vector<1xf32>
    %29 = vector.shape_cast %28 : vector<1xf32> to vector<1x1x1xf32>
    %30 = vector.extract %29[0, 0, 0] : f32 from vector<1x1x1xf32>
    %c0_9 = arith.constant 0 : index
    %c0_10 = arith.constant 0 : index
    %31 = memref.load %arg3[%c0_9, %c0_10] : memref<1x1xf32, #tpu.memory_space<smem>>
    memref.store %30, %arg3[%c0_9, %c0_10] : memref<1x1xf32, #tpu.memory_space<smem>>
    return
  }
  func.func @transform_0(%arg0: i32) -> (i32, i32) {
    %c0_i32 = arith.constant 0 : i32
    %c0_i32_0 = arith.constant 0 : i32
    return %arg0, %c0_i32 : i32, i32
  }
  func.func @transform_1(%arg0: i32) -> (i32, i32) {
    %c0_i32 = arith.constant 0 : i32
    %c0_i32_0 = arith.constant 0 : i32
    return %arg0, %c0_i32 : i32, i32
  }
  func.func @transform_2(%arg0: i32) -> (i32, i32) {
    %c0_i32 = arith.constant 0 : i32
    %c0_i32_0 = arith.constant 0 : i32
    return %arg0, %c0_i32 : i32, i32
  }
}

</mosaic_0001>

<llo_original>
// kernel: tpu_custom_call.1
$region0: #{tpu_custom_call.1}
  #allocation0 [shape = 'u32[]', space=smem, size = 0x4, offset = 0x4, fixed_abs, tag = 'smem constant byte address 0x4 - core index']
  #allocation1 [shape = 'u32[72,128]{1,0:T(1,128)}', space=vmem, size = 0x9000, scoped, tag = 'internal scratch']
  %s0 = inlined_call_operand.vmem [shape: f32[8,32], index: 0, kind: input, shape index: {}]
  %s1 = inlined_call_operand.vmem [shape: s32[8,1], index: 1, kind: input, shape index: {}]
  %s2 = inlined_call_operand.hbm [shape: f32[1,1], index: 2, kind: output, shape index: {}]
  %s3 = sld [smem:[#allocation0]]
  $region18: #{tpu_custom_call.1} parent=0
    _
  %s5 = ssub.s32 1, %s3
  %s6 = scalar_select 0, %s5, %s3
  $region1: #{tpu_custom_call.1} parent=0
    #allocation2 [shape = 'u8[512]{0}', space=smem, size = 0x200, scoped, tag = 'output window, operand 0, single buffered']
    #allocation3 [shape = 's32[1]{0}', space=sflag, size = 0x4, scoped, tag = 'scoped memory for tpu_custom_call.1']
    %7 = vsyncpa [#allocation3], 0
    // Predicated region
    $region2: #{tpu_custom_call.1} parent=1 // pred_check
      _
    $region3: #{tpu_custom_call.1} parent=1 // pred_check_branch
      %9 = sbr.rel (0) target = $region5
    $region4: #{tpu_custom_call.1} parent=1 // pred_region
      _
    $region5: #{tpu_custom_call.1} parent=1 // pred_fallthru
      _
    // Predicated region
    $region6: #{tpu_custom_call.1} parent=1 // pred_check
      _
    $region7: #{tpu_custom_call.1} parent=1 // pred_check_branch
      %11 = sbr.rel (0) target = $region9
    $region8: #{tpu_custom_call.1} parent=1 // pred_region
      _
    $region9: #{tpu_custom_call.1} parent=1 // pred_fallthru
      _
    %v12 = vld [vmem:[%s0] sm:$0xff]
    %vm13 = vcmask 261120
    %v14 = vsel %vm13, %v12, -inf
    %15 = vmax.xlane.f32.xlu0 %v14
    %v16 = vpop.xlane.xlu0 %15
    %v17 = vsub.f32 %v12, %v16
    %v18 = vmul.f32 %v17, 1.442695
    %v19 = vpow.pop %v18
    %v20 = vsel %vm13, %v19, 0.0
    %21 = vadd.xlane.f32.xlu0 %v20
    %v22 = vpop.xlane.xlu0 %21
    %v23 = vlog2.pop %v22
    %v24 = vmul.f32 %v23, 0.6931472
    %v25 = vld [vmem:[%s1] sm:$0xff]
    %v26 = vlaneseq
    %v27 = vand.u32 %v26, 127
    %28 = vset.pattern.permute.xlu0 0
    %29 = vperm.xlu0 %28, %v25
    %v30 = vpop.permute.xlu0 %29
    %vm31 = vcmp.eq.s32.totalorder %v27, %v30
    %v32 = vsel %vm31, %v12, 0.0
    %v33 = vsel %vm13, %v32, 0.0
    %34 = vadd.xlane.f32.xlu0 %v33
    %v35 = vpop.xlane.xlu0 %34
    %v36 = vadd.f32 %v16, %v24
    %v37 = vsub.f32 %v36, %v35
    %v38 = vlaneseq
    %v39 = vshrl.u32 %v38, 7
    %s40 = smul.u32 0, 8
    %v41 = vstv %s40
    %v42 = vadd.s32 %v41, %v39
    %vm43 = vcmp.lt.s32.totalorder %v42, 8
    %v44 = vsel %vm43, %v37, 0.0
    %vm45 = vcmask 7168
    %v46 = vsel %vm45, %v44, 0.0
    %47 = vadd.xlane.f32.xlu0 %v46
    %v48 = vpop.xlane.xlu0 %47
    %v49 = vrot.slane %v48, 4
    %v50 = vadd.f32 %v48, %v49
    %v51 = vrot.slane %v50, 2
    %v52 = vadd.f32 %v50, %v51
    %v53 = vrot.slane %v52, 1
    %v54 = vadd.f32 %v52, %v53
    %s55 = vtos %v54
    %s56 = scalar_lea.smem [#allocation2], 0
    %57 = sst [smem:[%s56]] %s55
    // Predicated region
    $region10: #{tpu_custom_call.1} parent=1 // pred_check
      _
    $region11: #{tpu_custom_call.1} parent=1 // pred_check_branch
      %59 = sbr.rel (0) target = $region13
    $region12: #{tpu_custom_call.1} parent=1 // pred_region
      %61 = vsyncadd [#allocation3], 0
      %s63 = sshll.u32 %s2, 4
      %s64 = int_to_ptr.hbm [resolvable:$true] %s63
      %66 = dma.smem_to_hbm [#allocation2], 16, %s64, [#allocation3]
    $region13: #{tpu_custom_call.1} parent=1 // pred_fallthru
      _
    // Predicated region
    $region14: #{tpu_custom_call.1} parent=1 // pred_check
      _
    $region15: #{tpu_custom_call.1} parent=1 // pred_check_branch
      %68 = sbr.rel (0) target = $region17
    $region16: #{tpu_custom_call.1} parent=1 // pred_region
      %70 = dma.done [#allocation3], 16
    $region17: #{tpu_custom_call.1} parent=1 // pred_fallthru
      _
    %71 = sfence
    %72 = vsyncpa [#allocation3], 1

</llo_original>
